<compile_context>
chip_gen: v6e
topology: v6e:2x2x1
jax: 0.10.0
libtpu: 0.0.40
codegen_flags: <defaults>
</compile_context>

<pallas_src>
import jax
import jax.numpy as jnp
from jax.experimental import pallas as pl
from jax.experimental.pallas import tpu as pltpu


def _identity_copy_kernel(x_ref, o_ref):
    # Pure mem-bound copy of one lane-dense VMEM tile.
    o_ref[...] = x_ref[...]


def net_name_forward(
    x,
    *,
    skip_copy=False,
    target_block_bytes=8 * 1024 * 1024,
    alias_input=False,
):
    """Pallas implementation of Net_name.forward(x) == x.

    skip_copy=True    -> return x directly (zero HBM traffic; optimal identity).
    alias_input=True  -> pass input_output_aliases={0: 0} so the output reuses
                         the input buffer (only beneficial when the caller
                         donates x; otherwise XLA inserts a defensive copy).
    """
    x = jnp.asarray(x)
    if skip_copy or x.ndim == 0 or x.size == 0:
        # Identity: nothing to compute. Scalars / empty arrays also take this path.
        return x

    shape = x.shape
    dtype = x.dtype
    itemsize = jnp.dtype(dtype).itemsize
    total = x.size

    # --- Generation-aware VMEM budget ------------------------------------
    try:
        vmem_cap = int(pltpu.get_tpu_info().vmem_capacity_bytes)
    except Exception:
        vmem_cap = 64 * 1024 * 1024  # conservative: v7x per-TensorCore VMEM
    vmem_budget = (vmem_cap * 3) // 4  # leave headroom for Mosaic scratch
    # 2 double-buffered input blocks + 2 output blocks must fit the budget.
    max_block_bytes = max(1 << 20, min(int(target_block_bytes), vmem_budget // 4))

    LANE = 128
    sublane = 8 * max(1, 4 // itemsize)  # f32: 8, bf16: 16, int8/fp8: 32

    # --- Flatten to a lane-dense layout and tile -------------------------
    if total % LANE == 0:
        # Preferred path: (rows, 128). Full lane utilization, zero layout
        # padding, and blocks of contiguous rows are contiguous in HBM.
        rows = total // LANE
        cols = LANE
        x_flat = x.reshape(rows, cols)
        row_bytes = cols * itemsize
        tile_rows = max(1, min(rows, max_block_bytes // row_bytes))
        if tile_rows < rows:
            # Respect dtype-aware sublane packing when dim 0 is tiled.
            tile_rows = max(sublane, (tile_rows // sublane) * sublane)
            tile_rows = min(tile_rows, rows)
        block_shape = (tile_rows, cols)
        grid = (pl.cdiv(rows, tile_rows),)
        index_map = lambda i: (i, 0)
        block_bytes = tile_rows * row_bytes
    else:
        # Rare fallback: element count not a multiple of 128. Copy as 1-D;
        # a full-extent block is exempt from the lane rule, and a tiled 1-D
        # block uses a (sublane*128)-multiple granularity (last partial block
        # is masked by Pallas).
        x_flat = x.reshape(total)
        tile = max(1, min(total, max_block_bytes // itemsize))
        if tile < total:
            gran = sublane * LANE
            tile = max(gran, (tile // gran) * gran)
            tile = min(tile, total)
        block_shape = (tile,)
        grid = (pl.cdiv(total, tile),)
        index_map = lambda i: (i,)
        block_bytes = tile * itemsize

    # --- Compiler params ---------------------------------------------------
    # TODO(synk): on v7x, drive both TensorCores explicitly (pltpu.CORE_PARALLEL
    # or pl.core_map over create_tensorcore_mesh) for up to ~2x aggregate copy BW.
    compiler_params = pltpu.CompilerParams(
        dimension_semantics=("parallel",),
        vmem_limit_bytes=int(
            min(vmem_budget, max(16 * 1024 * 1024, 4 * block_bytes + (4 << 20)))
        ),
    )

    extra = {}
    if alias_input:
        # Output aliases the (donated) input HBM buffer: no second allocation.
        extra["input_output_aliases"] = {0: 0}

    out_flat = pl.pallas_call(
        _identity_copy_kernel,
        out_shape=jax.ShapeDtypeStruct(x_flat.shape, dtype),
        grid=grid,
        in_specs=[pl.BlockSpec(block_shape, index_map)],
        out_specs=pl.BlockSpec(block_shape, index_map),
        compiler_params=compiler_params,
        **extra,
    )(x_flat)

    return out_flat.reshape(shape)


if __name__ == "__main__":
    key = jax.random.PRNGKey(0)
    k0, k1 = jax.random.split(key)

    # Small shape consistent with the (unconstrained) module: batch=2, C=4, H=W=16.
    x = jax.random.normal(k0, (2, 4, 16, 16), dtype=jnp.float32)
    out = jax.block_until_ready(net_name_forward(x))
    assert out.shape == x.shape and out.dtype == x.dtype
    assert bool(jnp.all(out == x))

    # Exercise the non-128-divisible fallback path (full-extent 1-D block).
    y = jax.random.normal(k1, (3, 5, 7), dtype=jnp.float32)
    out_y = jax.block_until_ready(net_name_forward(y))
    assert out_y.shape == y.shape and bool(jnp.all(out_y == y))

    print("KERNEL_OK")
</pallas_src>

<mosaic_0001>
module attributes {stable_mosaic.version = 11 : i64} {
  func.func @_identity_copy_kernel(%arg0: i32, %arg1: memref<16x128xf32, #tpu.memory_space<vmem>>, %arg2: memref<16x128xf32, #tpu.memory_space<vmem>>) attributes {dimension_semantics = [#tpu.dimension_semantics<parallel>], iteration_bounds = array<i64: 1>, scalar_prefetch = 0 : i64, scratch_operands = 0 : i64, tpu.core_type = #tpu.core_type<tc>, window_params = [{transform_indices = @transform_0, window_bounds = array<i64: 16, 128>}, {transform_indices = @transform_1, window_bounds = array<i64: 16, 128>}]} {
    %c0 = arith.constant 0 : index
    %c0_0 = arith.constant 0 : index
    %0 = vector.load %arg1[%c0, %c0_0] : memref<16x128xf32, #tpu.memory_space<vmem>>, vector<16x128xf32>
    %c0_1 = arith.constant 0 : index
    %c0_2 = arith.constant 0 : index
    %1 = vector.load %arg2[%c0_1, %c0_2] : memref<16x128xf32, #tpu.memory_space<vmem>>, vector<16x128xf32>
    tpu.vector_store %arg2[%c0_1, %c0_2], %0 {strides = array<i32>} : memref<16x128xf32, #tpu.memory_space<vmem>>, vector<16x128xf32>,
    return
  }
  func.func @transform_0(%arg0: i32) -> (i32, i32) {
    %c0_i32 = arith.constant 0 : i32
    %c0_i32_0 = arith.constant 0 : i32
    return %arg0, %c0_i32 : i32, i32
  }
  func.func @transform_1(%arg0: i32) -> (i32, i32) {
    %c0_i32 = arith.constant 0 : i32
    %c0_i32_0 = arith.constant 0 : i32
    return %arg0, %c0_i32 : i32, i32
  }
}

</mosaic_0001>

<llo_original>
// kernel: tpu_custom_call.1
$region0: #{tpu_custom_call.1}
  #allocation0 [shape = 'u32[]', space=smem, size = 0x4, offset = 0x4, fixed_abs, tag = 'smem constant byte address 0x4 - core index']
  #allocation1 [shape = 'u32[144,128]{1,0:T(1,128)}', space=vmem, size = 0x12000, scoped, tag = 'internal scratch']
  %s0 = inlined_call_operand.hbm [shape: f32[16,128], index: 0, kind: input, shape index: {}]
  %s1 = inlined_call_operand.hbm [shape: f32[16,128], index: 1, kind: output, shape index: {}]
  %s2 = sld [smem:[#allocation0]]
  $region18: #{tpu_custom_call.1} parent=0
    _
  %s4 = ssub.s32 1, %s2
  %s5 = scalar_select 0, %s4, %s2
  $region1: #{tpu_custom_call.1} parent=0
    #allocation2 [shape = 'u8[8192]{0}', space=vmem, size = 0x2000, scoped, tag = 'input window, operand 0, single buffered']
    #allocation3 [shape = 's32[1]{0}', space=sflag, size = 0x4, scoped, tag = 'scoped memory for tpu_custom_call.1']
    #allocation4 [shape = 's32[1]{0}', space=sflag, size = 0x4, scoped, tag = 'scoped memory for tpu_custom_call.1']
    #allocation5 [shape = 'u8[8192]{0}', space=vmem, size = 0x2000, scoped, tag = 'output window, operand 0, single buffered']
    %6 = vsyncpa [#allocation3], 0
    %7 = vsyncpa [#allocation4], 0
    // Predicated region
    $region2: #{tpu_custom_call.1} parent=1 // pred_check
      _
    $region3: #{tpu_custom_call.1} parent=1 // pred_check_branch
      %9 = sbr.rel (0) target = $region5
    $region4: #{tpu_custom_call.1} parent=1 // pred_region
      %s11 = ssub.s32 256, 256
      %12 = vsyncadd [#allocation3], %s11
      %s13 = sshll.u32 [#allocation2], 4
      %s14 = int_to_ptr.vmem [resolvable:$true] %s13
      %19 = dma.hbm_to_vmem [thread:$0]  %s0, 256, %s14, [#allocation3], 128, 128, 8
    $region5: #{tpu_custom_call.1} parent=1 // pred_fallthru
      _
    // Predicated region
    $region6: #{tpu_custom_call.1} parent=1 // pred_check
      _
    $region7: #{tpu_custom_call.1} parent=1 // pred_check_branch
      %21 = sbr.rel (0) target = $region9
    $region8: #{tpu_custom_call.1} parent=1 // pred_region
      %22 = dma.done [#allocation3], 256
    $region9: #{tpu_custom_call.1} parent=1 // pred_fallthru
      _
    %v23 = vld [vmem:[#allocation2] sm:$0xff]
    %v24 = vld [vmem:[#allocation2 + $0x8] sm:$0xff]
    %25 = vst [vmem:[#allocation5] sm:$0xff] %v23
    %26 = vst [vmem:[#allocation5 + $0x8] sm:$0xff] %v24
    // Predicated region
    $region10: #{tpu_custom_call.1} parent=1 // pred_check
      _
    $region11: #{tpu_custom_call.1} parent=1 // pred_check_branch
      %28 = sbr.rel (0) target = $region13
    $region12: #{tpu_custom_call.1} parent=1 // pred_region
      %s30 = ssub.s32 256, 256
      %31 = vsyncadd [#allocation4], %s30
      %s32 = sshll.u32 [#allocation5], 4
      %s33 = int_to_ptr.vmem [resolvable:$true] %s32
      %38 = dma.vmem_to_hbm [thread:$0]  %s33, 256, %s1, [#allocation4], 128, 128, 8
    $region13: #{tpu_custom_call.1} parent=1 // pred_fallthru
      _
    // Predicated region
    $region14: #{tpu_custom_call.1} parent=1 // pred_check
      _
    $region15: #{tpu_custom_call.1} parent=1 // pred_check_branch
      %40 = sbr.rel (0) target = $region17
    $region16: #{tpu_custom_call.1} parent=1 // pred_region
      %41 = dma.done [#allocation4], 256
    $region17: #{tpu_custom_call.1} parent=1 // pred_fallthru
      _
    %42 = vsyncpa [#allocation3], 1
    %43 = vsyncpa [#allocation4], 1

</llo_original>
